<compile_context>
chip_gen: v7x
topology: tpu7x:2x2x1
jax: 0.10.0
libtpu: 0.0.40
codegen_flags: <defaults>
</compile_context>

<pallas_src>
import functools

import jax
import jax.numpy as jnp
from jax.experimental import pallas as pl
from jax.experimental.pallas import tpu as pltpu


_TARGET_BLOCK_BYTES = 4 * 1024 * 1024   # ~2-4 MiB per DMA block (v6e/v7x roofline)
_VMEM_LIMIT_BYTES = 48 * 1024 * 1024    # safe on v5e/v6e (128 MiB) and v7x (64 MiB)


# ---------------------------------------------------------------------------
# Tile-size helpers (byte-budgeted)
# ---------------------------------------------------------------------------
def _pick_b_tile(b):
    """Largest divisor of B that is <= 8 (bounds block bytes, keeps megacore axis)."""
    if b <= 8:
        return b
    for d in range(8, 0, -1):
        if b % d == 0:
            return d
    return 1


def _pick_c_tile(c, bt, itemsize, nb, target_bytes):
    """Ct must be C itself or a multiple-of-128 divisor of C (lane constraints)."""
    if c % 128 != 0:
        return c
    cands = [d for d in range(128, c + 1, 128) if c % d == 0]
    fit = [d for d in cands if bt * d * 128 * itemsize <= target_bytes]
    ct = max(fit) if fit else 128
    # v7x megacore: if the batch axis has a single block, split C so Pass 1 has a
    # parallel axis with >= 2 iterations (both TensorCores stream x).
    if nb == 1 and ct == c and c >= 256:
        ct = max(d for d in cands if d < c)
    return ct


def _pick_hw_tile(hw_pad, bt, ct, itemsize, target_bytes):
    """Largest multiple-of-128 divisor of the padded HW within the byte budget."""
    best = 128
    for t in range(128, hw_pad + 1, 128):
        if hw_pad % t == 0 and bt * ct * t * itemsize <= target_bytes:
            best = t
    return best


# ---------------------------------------------------------------------------
# Kernels
# ---------------------------------------------------------------------------
def _pool_sum_kernel(x_ref, psum_ref):
    """Pass 1: streaming spatial sum into the resident (1, Bt, Ct) f32 output."""
    @pl.when(pl.program_id(2) == 0)
    def _():
        psum_ref[...] = jnp.zeros_like(psum_ref)
    # Load in native dtype, accumulate in f32; zero-pad contributes nothing.
    psum_ref[...] += jnp.sum(x_ref[...], axis=-1, dtype=jnp.float32)[None]


def _gate_from_psum(psum_ref, w1t_ref, b1_ref, w2t_ref, b2_ref, inv_hw):
    """(BN-folded) Linear -> ReLU -> Linear on the pooled means; returns (Bt, Ct)."""
    pooled = psum_ref[0] * inv_hw                                      # (Bt, C)
    h = jnp.dot(pooled, w1t_ref[...],
                preferred_element_type=jnp.float32) + b1_ref[...]      # (Bt, hidden)
    h = jnp.maximum(h, 0.0)
    return jnp.dot(h, w2t_ref[...],
                   preferred_element_type=jnp.float32) + b2_ref[...]   # (Bt, Ct)


def _broadcast_kernel(psum_ref, w1t_ref, b1_ref, w2t_ref, b2_ref, o_ref, *, inv_hw):
    """Pass 2: MLP (tiny, recomputed per step) + lane-dense broadcast of the gate."""
    g = _gate_from_psum(psum_ref, w1t_ref, b1_ref, w2t_ref, b2_ref, inv_hw)
    o_ref[...] = jnp.broadcast_to(g[:, :, None], o_ref.shape).astype(o_ref.dtype)


def _apply_kernel(psum_ref, w1t_ref, b1_ref, w2t_ref, b2_ref, x_ref, o_ref, *, inv_hw):
    """Fused Pass 2: write x * gate directly (no redundant broadcast tensor)."""
    g = _gate_from_psum(psum_ref, w1t_ref, b1_ref, w2t_ref, b2_ref, inv_hw)
    o_ref[...] = (x_ref[...].astype(jnp.float32) * g[:, :, None]).astype(o_ref.dtype)


# ---------------------------------------------------------------------------
# Wrapper
# ---------------------------------------------------------------------------
def _channel_gate(x_nchw, params, *, bn_eps=1e-5, apply_to_input=False,
                  max_block_bytes=_TARGET_BLOCK_BYTES):
    B, C, H, W = x_nchw.shape
    assert H == W, "avg_pool2d(x, H, stride=H) global-pool semantics need square maps"
    HW = H * W
    hidden = params["w1"].shape[0]

    # Fold eval-mode BatchNorm1d into the first Linear (host side, tiny).
    scale = params["bn_gamma"] * jax.lax.rsqrt(params["bn_var"] + bn_eps)   # (hidden,)
    w1t = (params["w1"] * scale[:, None]).T.astype(jnp.float32)             # (C, hidden)
    b1 = ((params["b1"] - params["bn_mean"]) * scale
          + params["bn_beta"]).reshape(1, hidden).astype(jnp.float32)       # (1, hidden)
    w2t = params["w2"].T.astype(jnp.float32)                                # (hidden, C)
    b2 = params["b2"].reshape(1, C).astype(jnp.float32)                     # (1, C)

    itemsize = x_nchw.dtype.itemsize
    HW_pad = ((HW + 127) // 128) * 128
    x_flat = x_nchw.reshape(B, C, HW)
    if HW_pad != HW:
        # Zero-pad the spatial axis to a lane multiple: pads add 0 to the sums
        # (the divisor stays the true HW) and keep every store unmasked.
        x_flat = jnp.pad(x_flat, ((0, 0), (0, 0), (0, HW_pad - HW)))

    Bt = _pick_b_tile(B)
    nb = B // Bt
    Ct = _pick_c_tile(C, Bt, itemsize, nb, max_block_bytes)
    nc = C // Ct
    HWt = _pick_hw_tile(HW_pad, Bt, Ct, itemsize, max_block_bytes)
    nk = HW_pad // HWt
    inv_hw = float(1.0 / HW)

    x_bytes = B * C * HW_pad * itemsize
    psum_bytes = nb * Bt * C * 4
    w_bytes = 4 * (C * hidden + hidden + hidden * C + C)

    # ---- Pass 1: streaming spatial-sum reduction -> (nb, Bt, C) f32 --------
    # (nb, Bt, C) output keeps the sublane block == full dim for ANY Bt <= 8,
    # so odd batch sizes never violate the (8, 128) block constraint.
    psum = pl.pallas_call(
        _pool_sum_kernel,
        out_shape=jax.ShapeDtypeStruct((nb, Bt, C), jnp.float32),
        grid=(nb, nc, nk),
        in_specs=[pl.BlockSpec((Bt, Ct, HWt), lambda b, c, k: (b, c, k))],
        out_specs=pl.BlockSpec((1, Bt, Ct), lambda b, c, k: (b, 0, c)),   # resident over k
        compiler_params=pltpu.CompilerParams(
            dimension_semantics=("parallel", "parallel", "arbitrary"),
            vmem_limit_bytes=_VMEM_LIMIT_BYTES),
        cost_estimate=pl.CostEstimate(
            flops=B * C * HW_pad, transcendentals=0,
            bytes_accessed=x_bytes + psum_bytes),
    )(x_flat)

    # ---- Pass 2: MLP + lane-dense broadcast (optionally fused with x*gate) --
    mlp_flops = 2 * B * (C * hidden + hidden * C)
    common_in_specs = [
        pl.BlockSpec((1, Bt, C), lambda b, c, k: (b, 0, 0)),     # pooled sums (resident)
        pl.BlockSpec((C, hidden), lambda b, c, k: (0, 0)),       # w1^T (BN folded)
        pl.BlockSpec((1, hidden), lambda b, c, k: (0, 0)),       # b1   (BN folded)
        pl.BlockSpec((hidden, Ct), lambda b, c, k: (0, c)),      # w2^T channel slab
        pl.BlockSpec((1, Ct), lambda b, c, k: (0, c)),           # b2   channel slab
    ]
    if apply_to_input:
        kern = functools.partial(_apply_kernel, inv_hw=inv_hw)
        in_specs = common_in_specs + [
            pl.BlockSpec((Bt, Ct, HWt), lambda b, c, k: (b, c, k))]
        operands = (psum, w1t, b1, w2t, b2, x_flat)
        pass2_bytes = 2 * x_bytes + psum_bytes + w_bytes
    else:
        kern = functools.partial(_broadcast_kernel, inv_hw=inv_hw)
        in_specs = common_in_specs
        operands = (psum, w1t, b1, w2t, b2)
        pass2_bytes = x_bytes + psum_bytes + w_bytes

    out = pl.pallas_call(
        kern,
        out_shape=jax.ShapeDtypeStruct((B, C, HW_pad), x_nchw.dtype),
        grid=(nb, nc, nk),
        in_specs=in_specs,
        out_specs=pl.BlockSpec((Bt, Ct, HWt), lambda b, c, k: (b, c, k)),
        compiler_params=pltpu.CompilerParams(
            dimension_semantics=("parallel", "parallel", "parallel"),
            vmem_limit_bytes=_VMEM_LIMIT_BYTES),
        cost_estimate=pl.CostEstimate(
            flops=B * C * HW_pad + mlp_flops, transcendentals=0,
            bytes_accessed=pass2_bytes),
    )(*operands)

    if HW_pad != HW:
        out = out[:, :, :HW]
    return out.reshape(B, C, H, W)


def channel_gate_forward(x_nchw, params, *, bn_eps=1e-5,
                         max_block_bytes=_TARGET_BLOCK_BYTES):
    """Spec-faithful forward: returns the gate expanded to x's shape (B, C, H, W)."""
    return _channel_gate(x_nchw, params, bn_eps=bn_eps, apply_to_input=False,
                         max_block_bytes=max_block_bytes)


def channel_gate_apply(x_nchw, params, *, bn_eps=1e-5,
                       max_block_bytes=_TARGET_BLOCK_BYTES):
    """Fused variant: x * ChannelGate(x) (what BAM's consumer computes) -- skips
    materializing the fully redundant broadcast tensor (~25-50% less HBM traffic)."""
    return _channel_gate(x_nchw, params, bn_eps=bn_eps, apply_to_input=True,
                         max_block_bytes=max_block_bytes)


# ---------------------------------------------------------------------------
# Params + pure-JAX reference
# ---------------------------------------------------------------------------
def init_params(key, gate_channel, reduction_ratio=16):
    hidden = gate_channel // reduction_ratio
    keys = jax.random.split(key, 8)
    bound1 = 1.0 / (gate_channel ** 0.5)
    bound2 = 1.0 / (hidden ** 0.5)
    return {
        "w1": jax.random.uniform(keys[0], (hidden, gate_channel), jnp.float32,
                                 -bound1, bound1),
        "b1": jax.random.uniform(keys[1], (hidden,), jnp.float32, -bound1, bound1),
        "w2": jax.random.uniform(keys[2], (gate_channel, hidden), jnp.float32,
                                 -bound2, bound2),
        "b2": jax.random.uniform(keys[3], (gate_channel,), jnp.float32,
                                 -bound2, bound2),
        # Non-trivial eval-mode BN stats/affine so the BN fold is exercised.
        "bn_gamma": jax.random.uniform(keys[4], (hidden,), jnp.float32, 0.5, 1.5),
        "bn_beta": jax.random.uniform(keys[5], (hidden,), jnp.float32, -0.5, 0.5),
        "bn_mean": jax.random.uniform(keys[6], (hidden,), jnp.float32, -0.5, 0.5),
        "bn_var": jax.random.uniform(keys[7], (hidden,), jnp.float32, 0.5, 1.5),
    }


def _reference(x_nchw, p, eps=1e-5):
    B, C, H, W = x_nchw.shape
    pooled = jnp.mean(x_nchw.astype(jnp.float32), axis=(2, 3))          # (B, C)
    h = pooled @ p["w1"].T + p["b1"]
    h = (h - p["bn_mean"]) / jnp.sqrt(p["bn_var"] + eps)
    h = h * p["bn_gamma"] + p["bn_beta"]
    h = jnp.maximum(h, 0.0)
    g = h @ p["w2"].T + p["b2"]                                         # (B, C)
    return jnp.broadcast_to(g[:, :, None, None], (B, C, H, W)).astype(x_nchw.dtype)


if __name__ == "__main__":
    key = jax.random.PRNGKey(0)
    kx1, kx2, kp = jax.random.split(key, 3)

    # Case 1: lane-aligned spatial (HW = 256), gate_channel=32, r=16 -> hidden=2.
    B, C, H, W = 2, 32, 16, 16
    x1 = jax.random.normal(kx1, (B, C, H, W), jnp.float32)
    params = init_params(kp, gate_channel=C, reduction_ratio=16)

    out1 = jax.block_until_ready(channel_gate_forward(x1, params))
    ref1 = _reference(x1, params)
    assert out1.shape == x1.shape
    assert jnp.allclose(out1, ref1, atol=1e-5, rtol=1e-5), "mismatch vs JAX reference"

    fused1 = jax.block_until_ready(channel_gate_apply(x1, params))
    assert jnp.allclose(fused1, x1 * ref1, atol=1e-5, rtol=1e-5), "fused mismatch"

    # Case 2: non-multiple-of-128 spatial (zero-pad path), odd batch (Bt=5),
    # tiny block budget to force a multi-step streaming reduction over HW.
    B2, H2 = 10, 12
    x2 = jax.random.normal(kx2, (B2, C, H2, H2), jnp.float32)
    out2 = jax.block_until_ready(
        channel_gate_forward(x2, params, max_block_bytes=32 * 1024))
    ref2 = _reference(x2, params)
    assert out2.shape == x2.shape
    assert jnp.allclose(out2, ref2, atol=1e-5, rtol=1e-5), "padded-path mismatch"

    fused2 = jax.block_until_ready(
        channel_gate_apply(x2, params, max_block_bytes=32 * 1024))
    assert jnp.allclose(fused2, x2 * ref2, atol=1e-5, rtol=1e-5), "padded fused mismatch"

    print("KERNEL_OK")
</pallas_src>

<mosaic_0001>
module attributes {stable_mosaic.version = 11 : i64} {
  func.func @_pool_sum_kernel(%arg0: i32, %arg1: i32, %arg2: i32, %arg3: memref<2x32x256xf32, #tpu.memory_space<vmem>>, %arg4: memref<1x2x32xf32, #tpu.memory_space<vmem>>) attributes {dimension_semantics = [#tpu.dimension_semantics<parallel>, #tpu.dimension_semantics<parallel>, #tpu.dimension_semantics<arbitrary>], iteration_bounds = array<i64: 1, 1, 1>, scalar_prefetch = 0 : i64, scratch_operands = 0 : i64, tpu.core_type = #tpu.core_type<tc>, window_params = [{transform_indices = @transform_0, window_bounds = array<i64: 2, 32, 256>}, {transform_indices = @transform_1, window_bounds = array<i64: 1, 2, 32>}]} {
    %c0_i32 = arith.constant 0 : i32
    %0 = arith.cmpi eq, %arg2, %c0_i32 : i32
    %1 = arith.extui %0 : i1 to i32
    %c0_i32_0 = arith.constant 0 : i32
    %2 = arith.cmpi ne, %1, %c0_i32_0 : i32
    scf.if %2 {
      %cst_9 = arith.constant 0.000000e+00 : f32
      %9 = vector.broadcast %cst_9 : f32 to vector<1x2x32xf32>
      %c0_10 = arith.constant 0 : index
      %c0_11 = arith.constant 0 : index
      %c0_12 = arith.constant 0 : index
      %10 = vector.load %arg4[%c0_10, %c0_11, %c0_12] : memref<1x2x32xf32, #tpu.memory_space<vmem>>, vector<1x2x32xf32>
      tpu.vector_store %arg4[%c0_10, %c0_11, %c0_12], %9 {strides = array<i32>} : memref<1x2x32xf32, #tpu.memory_space<vmem>>, vector<1x2x32xf32>,
    } else {
    }
    %c0 = arith.constant 0 : index
    %c0_1 = arith.constant 0 : index
    %c0_2 = arith.constant 0 : index
    %3 = vector.load %arg4[%c0, %c0_1, %c0_2] : memref<1x2x32xf32, #tpu.memory_space<vmem>>, vector<1x2x32xf32>
    %c0_3 = arith.constant 0 : index
    %c0_4 = arith.constant 0 : index
    %c0_5 = arith.constant 0 : index
    %4 = vector.load %arg3[%c0_3, %c0_4, %c0_5] : memref<2x32x256xf32, #tpu.memory_space<vmem>>, vector<2x32x256xf32>
    %cst = arith.constant dense<0.000000e+00> : vector<2x32xf32>
    %5 = vector.multi_reduction <add>, %4, %cst [2] : vector<2x32x256xf32> to vector<2x32xf32>
    %6 = vector.shape_cast %5 : vector<2x32xf32> to vector<1x2x32xf32>
    %7 = arith.addf %3, %6 : vector<1x2x32xf32>
    %c0_6 = arith.constant 0 : index
    %c0_7 = arith.constant 0 : index
    %c0_8 = arith.constant 0 : index
    %8 = vector.load %arg4[%c0_6, %c0_7, %c0_8] : memref<1x2x32xf32, #tpu.memory_space<vmem>>, vector<1x2x32xf32>
    tpu.vector_store %arg4[%c0_6, %c0_7, %c0_8], %7 {strides = array<i32>} : memref<1x2x32xf32, #tpu.memory_space<vmem>>, vector<1x2x32xf32>,
    return
  }
  func.func @transform_0(%arg0: i32, %arg1: i32, %arg2: i32) -> (i32, i32, i32) {
    %c0_i32 = arith.constant 0 : i32
    return %arg0, %arg1, %arg2 : i32, i32, i32
  }
  func.func @transform_1(%arg0: i32, %arg1: i32, %arg2: i32) -> (i32, i32, i32) {
    %c0_i32 = arith.constant 0 : i32
    %c0_i32_0 = arith.constant 0 : i32
    return %arg0, %c0_i32, %arg1 : i32, i32, i32
  }
}

</mosaic_0001>

<llo_original>
// kernel: tpu_custom_call.1
$region0: #{tpu_custom_call.1}
  #allocation0 [shape = 'u32[]', space=smem, size = 0x4, offset = 0x4, fixed_abs, tag = 'smem constant byte address 0x4 - core index']
  #allocation1 [shape = 'u32[144,128]{1,0:T(1,128)}', space=vmem, size = 0x12000, scoped, tag = 'internal scratch']
  %s0 = inlined_call_operand.hbm [shape: f32[2,32,256], index: 0, kind: input, shape index: {}]
  %s1 = inlined_call_operand.hbm [shape: f32[1,2,32], index: 1, kind: output, shape index: {}]
  %s2 = sld [smem:[#allocation0]]
  $region22: #{tpu_custom_call.1} parent=0
    _
  %s4 = ssub.s32 1, %s2
  %s5 = scalar_select 0, %s4, %s2
  $region1: #{tpu_custom_call.1} parent=0
    #allocation2 [shape = 'u8[65536]{0}', space=vmem, size = 0x10000, scoped, tag = 'input window, operand 0, single buffered']
    #allocation3 [shape = 's32[1]{0}', space=sflag, size = 0x4, scoped, tag = 'scoped memory for tpu_custom_call.1']
    #allocation4 [shape = 's32[1]{0}', space=sflag, size = 0x4, scoped, tag = 'scoped memory for tpu_custom_call.1']
    #allocation5 [shape = 'u8[1024]{0}', space=vmem, size = 0x400, scoped, tag = 'output window, operand 0, single buffered']
    %6 = vsyncpa [#allocation3], 0
    %7 = vsyncpa [#allocation4], 0
    // Predicated region
    $region2: #{tpu_custom_call.1} parent=1 // pred_check
      _
    $region3: #{tpu_custom_call.1} parent=1 // pred_check_branch
      %9 = sbr.rel (0) target = $region5
    $region4: #{tpu_custom_call.1} parent=1 // pred_region
      %s11 = ssub.s32 2048, 2048
      %12 = vsyncadd [#allocation3], %s11
      %s13 = sshll.u32 [#allocation2], 4
      %s14 = int_to_ptr.vmem [resolvable:$true] %s13
      %19 = dma.hbm_to_vmem [thread:$0]  %s0, 2048, %s14, [#allocation3], 256, 256, 16
    $region5: #{tpu_custom_call.1} parent=1 // pred_fallthru
      _
    // Predicated region
    $region6: #{tpu_custom_call.1} parent=1 // pred_check
      _
    $region7: #{tpu_custom_call.1} parent=1 // pred_check_branch
      %21 = sbr.rel (0) target = $region9
    $region8: #{tpu_custom_call.1} parent=1 // pred_region
      %22 = dma.done [#allocation3], 2048
    $region9: #{tpu_custom_call.1} parent=1 // pred_fallthru
      _
    %p23 = scmp.eq.s32.totalorder 0, 0
    // Predicated region
    $region10: #{tpu_custom_call.1} parent=1 // pred_check
      %p24 = pneg %p23
    $region11: #{tpu_custom_call.1} parent=1 // pred_check_branch
      %26 = sbr.rel (%p24) target = $region13
    $region12: #{tpu_custom_call.1} parent=1 // pred_region
      %vm27 = vcmask 254976
      %28 = vst.msk [vmem:[#allocation5] sm:$0x3] %vm27, 0.0
    $region13: #{tpu_custom_call.1} parent=1 // pred_fallthru
      _
    %v29 = vld [vmem:[#allocation5] sm:$0x3]
    %v30 = vld [vmem:[#allocation2] sm:$0xff]
    %v31 = vld [vmem:[#allocation2 + $0x8] sm:$0xff]
    %v32 = vld [vmem:[#allocation2 + $0x10] sm:$0xff]
    %v33 = vld [vmem:[#allocation2 + $0x18] sm:$0xff]
    %v34 = vld [vmem:[#allocation2 + $0x20] sm:$0xff]
    %v35 = vld [vmem:[#allocation2 + $0x28] sm:$0xff]
    %v36 = vld [vmem:[#allocation2 + $0x30] sm:$0xff]
    %v37 = vld [vmem:[#allocation2 + $0x38] sm:$0xff]
    %v38 = vld [vmem:[#allocation2 + $0x40] sm:$0xff]
    %v39 = vld [vmem:[#allocation2 + $0x48] sm:$0xff]
    %v40 = vld [vmem:[#allocation2 + $0x50] sm:$0xff]
    %v41 = vld [vmem:[#allocation2 + $0x58] sm:$0xff]
    %v42 = vld [vmem:[#allocation2 + $0x60] sm:$0xff]
    %v43 = vld [vmem:[#allocation2 + $0x68] sm:$0xff]
    %v44 = vld [vmem:[#allocation2 + $0x70] sm:$0xff]
    %v45 = vld [vmem:[#allocation2 + $0x78] sm:$0xff]
    %v46 = vadd.f32 %v30, %v31
    %47 = vadd.xlane.f32.xlu0 %v46
    %v48 = vpop.xlane.xlu0 %47
    %v49 = vadd.f32 %v32, %v33
    %50 = vadd.xlane.f32.xlu0 %v49
    %v51 = vpop.xlane.xlu0 %50
    %v52 = vadd.f32 %v34, %v35
    %53 = vadd.xlane.f32.xlu0 %v52
    %v54 = vpop.xlane.xlu0 %53
    %v55 = vadd.f32 %v36, %v37
    %56 = vadd.xlane.f32.xlu0 %v55
    %v57 = vpop.xlane.xlu0 %56
    %v58 = vadd.f32 %v38, %v39
    %59 = vadd.xlane.f32.xlu0 %v58
    %v60 = vpop.xlane.xlu0 %59
    %v61 = vadd.f32 %v40, %v41
    %62 = vadd.xlane.f32.xlu0 %v61
    %v63 = vpop.xlane.xlu0 %62
    %v64 = vadd.f32 %v42, %v43
    %65 = vadd.xlane.f32.xlu0 %v64
    %v66 = vpop.xlane.xlu0 %65
    %v67 = vadd.f32 %v44, %v45
    %68 = vadd.xlane.f32.xlu0 %v67
    %v69 = vpop.xlane.xlu0 %68
    %v78 = vlaneseq
    %v79 = vand.u32 %v78, 127
    %v80 = vlaneseq
    %v81 = vshrl.u32 %v80, 7
    %v82 = vsub.s32 %v79, %v81
    %v83 = vrot.slane %v48, %v82
    %v84 = vadd.s32 %v79, 4294967288
    %v85 = vlaneseq
    %v86 = vshrl.u32 %v85, 7
    %v87 = vsub.s32 %v84, %v86
    %v88 = vrot.slane %v51, %v87
    %vm89 = vcmask 130112
    %v90 = vsel %vm89, %v88, %v83
    %v91 = vadd.s32 %v79, 4294967280
    %v92 = vlaneseq
    %v93 = vshrl.u32 %v92, 7
    %v94 = vsub.s32 %v91, %v93
    %v95 = vrot.slane %v54, %v94
    %vm96 = vcmask 195712
    %v97 = vsel %vm96, %v95, %v90
    %v98 = vadd.s32 %v79, 4294967272
    %v99 = vlaneseq
    %v100 = vshrl.u32 %v99, 7
    %v101 = vsub.s32 %v98, %v100
    %v102 = vrot.slane %v57, %v101
    %vm103 = vcmask 261312
    %v104 = vsel %vm103, %v102, %v97
    %v105 = vlaneseq
    %v106 = vshrl.u32 %v105, 7
    %v107 = vsub.s32 %v79, %v106
    %v108 = vrot.slane %v60, %v107
    %v109 = vlaneseq
    %v110 = vshrl.u32 %v109, 7
    %v111 = vsub.s32 %v84, %v110
    %v112 = vrot.slane %v63, %v111
    %v113 = vsel %vm89, %v112, %v108
    %v114 = vlaneseq
    %v115 = vshrl.u32 %v114, 7
    %v116 = vsub.s32 %v91, %v115
    %v117 = vrot.slane %v66, %v116
    %v118 = vsel %vm96, %v117, %v113
    %v119 = vlaneseq
    %v120 = vshrl.u32 %v119, 7
    %v121 = vsub.s32 %v98, %v120
    %v122 = vrot.slane %v69, %v121
    %v123 = vsel %vm103, %v122, %v118
    %vm124 = vcmask 1041409
    %v125 = vsel %vm124, %v123, %v104
    %v127 = vadd.f32 %v29, %v125
    %vm128 = vcmask 254976
    %129 = vst.msk [vmem:[#allocation5] sm:$0x3] %vm128, %v127
    // Predicated region
    $region14: #{tpu_custom_call.1} parent=1 // pred_check
      _
    $region15: #{tpu_custom_call.1} parent=1 // pred_check_branch
      %131 = sbr.rel (0) target = $region17
    $region16: #{tpu_custom_call.1} parent=1 // pred_region
      %s133 = ssub.s32 32, 32
      %134 = vsyncadd [#allocation4], %s133
      %s136 = sshll.u32 [#allocation5], 4
      %s137 = int_to_ptr.vmem [resolvable:$true] %s136
      %139 = dma.vmem_to_hbm [thread:$0]  %s137, 32, %s1, [#allocation4]
    $region17: #{tpu_custom_call.1} parent=1 // pred_fallthru
      _
    // Predicated region
    $region18: #{tpu_custom_call.1} parent=1 // pred_check
      _
    $region19: #{tpu_custom_call.1} parent=1 // pred_check_branch
      %141 = sbr.rel (0) target = $region21
    $region20: #{tpu_custom_call.1} parent=1 // pred_region
      %142 = dma.done [#allocation4], 32
    $region21: #{tpu_custom_call.1} parent=1 // pred_fallthru
      _
    %143 = vsyncpa [#allocation3], 1
    %144 = vsyncpa [#allocation4], 1

</llo_original>
